<compile_context>
chip_gen: v7x
topology: tpu7x:2x2x1
jax: 0.10.0
libtpu: 0.0.40
codegen_flags: <defaults>
</compile_context>

<pallas_src>
import functools

import numpy as np
import jax
import jax.numpy as jnp
from jax.experimental import pallas as pl
from jax.experimental.pallas import tpu as pltpu


# ----------------------------- parameter-only helpers (plain JAX) ------------

def _log_softmax_pair(w):
    """BaseModule.log_softmax: w is (2, ...) -> (w0 - lse, w1 - lse)."""
    w0, w1 = w[0], w[1]
    tot = jnp.logaddexp(w0, w1)
    return w0 - tot, w1 - tot


def _shorter_forward(y, y_dim):
    """ShorterLayer.forward on a small parameter-only (Y, 2**n_bits) array."""
    _, X = y.shape
    assert X >= y_dim
    if X == y_dim:
        return y
    y1 = y[:, :y_dim]
    y2 = jax.scipy.special.logsumexp(y[:, y_dim:], axis=-1, keepdims=True) \
        - np.log(X - y_dim)
    return jnp.logaddexp(y1, y2)


def build_shuffle_params(key, x_dim=4, y_dim=1):
    """Deterministic parameters mirroring ShuffleLayer.build()."""
    n_bits = int(np.ceil(np.log(x_dim) / np.log(2)))
    k1, k2 = jax.random.split(key)
    w = jax.random.normal(k1, (2, y_dim, n_bits), dtype=jnp.float32)
    deny_w = jax.random.normal(k2, (2, y_dim), dtype=jnp.float32)
    # AddressLayer constants: bit decomposition (MSB first) of 0..2**n_bits-1.
    a = np.arange(2 ** n_bits).reshape(-1, 1)
    mul = (2 ** (n_bits - 1 - np.arange(n_bits))).reshape(1, -1)
    b = (a // mul) % 2
    b0 = jnp.asarray(b, dtype=jnp.float32)            # (2**n_bits, n_bits)
    b1 = jnp.asarray(1 - b, dtype=jnp.float32)
    return dict(w=w, deny_w=deny_w, b0=b0, b1=b1), n_bits


# ----------------------------- Pallas kernel ---------------------------------

def _shuffle_kernel(dw_ref, ey_ref, x0_ref, x1_ref, out_ref, *, y_dim, use_deny):
    # dw_ref : SMEM (2, Y)  deny log-softmax weights (scalar reads)
    # ey_ref : VMEM (X, Y)  exp(address/shorter weights), parameter-only, resident
    # x*_ref : VMEM (X, TB) batch-in-lanes tiles (lane-dense)
    # out_ref: VMEM (2*Y, TB) packed [y_0 rows ; y_1 rows]
    x0 = x0_ref[...].astype(jnp.float32)
    x1 = x1_ref[...].astype(jnp.float32)
    ey = ey_ref[...].astype(jnp.float32)

    neg_inf = jnp.float32(-jnp.inf)
    zero = jnp.float32(0.0)

    # Shared (j-independent) stabilization: one exp per input element total.
    m0 = jnp.max(x0, axis=0, keepdims=True)                    # (1, TB)
    m1 = jnp.max(x1, axis=0, keepdims=True)
    m0s = jnp.where(m0 == neg_inf, zero, m0)                   # all -inf row guard
    m1s = jnp.where(m1 == neg_inf, zero, m1)
    e0 = jnp.exp(x0 - m0s)                                     # (X, TB), <= 1
    e1 = jnp.exp(x1 - m1s)

    log2 = jnp.float32(np.log(2.0))
    rows0, rows1 = [], []
    for j in range(y_dim):  # Y is tiny (default 1) and static -> unrolled
        eyj = ey[:, j:j + 1]                                   # (X, 1) lane-broadcast
        l0 = m0s + jnp.log(jnp.sum(eyj * e0, axis=0, keepdims=True))   # (1, TB)
        l1 = m1s + jnp.log(jnp.sum(eyj * e1, axis=0, keepdims=True))
        if use_deny:
            dw0j = dw_ref[0, j]                                # SMEM scalars
            dw1j = dw_ref[1, j]
            a = dw0j + l0
            b = dw1j + l1
            mx = jnp.maximum(a, b)
            mxs = jnp.where(mx == neg_inf, zero, mx)
            o0 = mxs + jnp.log(jnp.exp(a - mxs) + jnp.exp(b - mxs))
            # DenyLayer (per spec): y_1 = logaddexp(w_0 + x_1, w_0 + x_1)
            #                           = w_0 + x_1 + log 2.  Intentional — do not "fix".
            o1 = dw0j + l1 + log2
        else:
            o0, o1 = l0, l1
        rows0.append(o0)
        rows1.append(o1)

    out = jnp.concatenate(rows0 + rows1, axis=0)               # (2*Y, TB)
    out_ref[...] = out.astype(out_ref.dtype)


def _round_up(n, m):
    return ((n + m - 1) // m) * m


def shuffle_layer_forward(params, x0, x1, *, x_dim=4, y_dim=1, use_deny=True,
                          block_b=None):
    """Pallas implementation of ShuffleLayer.forward for x_0, x_1 of shape (B, X)."""
    B, X = x0.shape
    assert x0.shape == x1.shape and X == x_dim
    out_dtype = x0.dtype

    # ---- parameter-only precompute (batch-independent, tiny) -> plain JAX ----
    w0, w1 = _log_softmax_pair(params["w"])                    # (Y, n_bits)
    y = w0 @ params["b0"].T + w1 @ params["b1"].T              # AddressLayer: (Y, 2**n_bits)
    y = _shorter_forward(y, x_dim)                             # ShorterLayer: (Y, X)
    ey_t = jnp.exp(y).astype(jnp.float32).T                    # (X, Y); values in (0, 2]
    if use_deny:
        dw0, dw1 = _log_softmax_pair(params["deny_w"])         # (Y,)
        dw = jnp.stack([dw0, dw1]).astype(jnp.float32)         # (2, Y)
    else:
        dw = jnp.zeros((2, y_dim), jnp.float32)

    # ---- lane-dense layout: batch along lanes (last dim) ----
    x0_t = x0.T                                                # (X, B)
    x1_t = x1.T

    # ---- batch tile: multiple of 128 lanes, >= ~8 grid blocks when possible ----
    if block_b is None:
        block_b = 65536           # ~2 MiB per (8,128)-padded f32 input buffer
    min_blocks = 8                # keep v7x's 2 TensorCores + the DMA pipeline busy
    cap = max(128, _round_up(pl.cdiv(B, min_blocks), 128))
    block_b = max(128, min(_round_up(block_b, 128), cap))
    Bp = _round_up(B, block_b)
    if Bp != B:
        x0_t = jnp.pad(x0_t, ((0, 0), (0, Bp - B)))
        x1_t = jnp.pad(x1_t, ((0, 0), (0, Bp - B)))
    grid = (Bp // block_b,)

    # advisory cost hint: HBM-read-bound kernel
    itemsize = jnp.dtype(x0.dtype).itemsize
    ce = pl.CostEstimate(
        flops=int(B * y_dim * (4 * X + 10)),
        transcendentals=int(B * (2 * X + (4 if use_deny else 2) * y_dim)),
        bytes_accessed=int(2 * B * X * itemsize + 2 * B * y_dim * itemsize
                           + (X * y_dim + 2 * y_dim) * 4),
    )

    kern = functools.partial(_shuffle_kernel, y_dim=y_dim, use_deny=use_deny)
    out = pl.pallas_call(
        kern,
        out_shape=jax.ShapeDtypeStruct((2 * y_dim, Bp), out_dtype),
        grid=grid,
        in_specs=[
            pl.BlockSpec(memory_space=pltpu.MemorySpace.SMEM),        # deny weights (scalars)
            pl.BlockSpec((x_dim, y_dim), lambda i: (0, 0)),           # exp(y).T, resident
            pl.BlockSpec((x_dim, block_b), lambda i: (0, i)),         # x_0.T tile (lane-dense)
            pl.BlockSpec((x_dim, block_b), lambda i: (0, i)),         # x_1.T tile (lane-dense)
        ],
        out_specs=pl.BlockSpec((2 * y_dim, block_b), lambda i: (0, i)),
        compiler_params=pltpu.CompilerParams(
            dimension_semantics=("parallel",)),
        cost_estimate=ce,
    )(dw, ey_t, x0_t, x1_t)

    # split packed lane-dense output back into PyTorch-shaped (B, Y) arrays
    y0 = out[:y_dim, :B].T
    y1 = out[y_dim:, :B].T
    return y0, y1


# ----------------------------- pure-JAX reference ----------------------------

def _reference(params, x0, x1, *, x_dim, y_dim, use_deny):
    B, X = x0.shape
    Y = y_dim
    w0, w1 = _log_softmax_pair(params["w"])
    y = w0 @ params["b0"].T + w1 @ params["b1"].T
    y = _shorter_forward(y, x_dim)
    y0 = jax.scipy.special.logsumexp(y.reshape(1, Y, X) + x0.reshape(B, 1, X), axis=2)
    y1 = jax.scipy.special.logsumexp(y.reshape(1, Y, X) + x1.reshape(B, 1, X), axis=2)
    if use_deny:
        dw0, dw1 = _log_softmax_pair(params["deny_w"])
        dw0 = dw0.reshape(1, Y)
        dw1 = dw1.reshape(1, Y)
        y0, y1 = (jnp.logaddexp(dw0 + y0, dw1 + y1),
                  jnp.logaddexp(dw0 + y1, dw0 + y1))
    return y0, y1


if __name__ == "__main__":
    X_DIM, Y_DIM, USE_DENY = 4, 1, True
    B = 512   # small demo batch; block_b=128 -> 4 pipelined/parallel grid blocks

    key = jax.random.PRNGKey(0)
    kp, k0, k1 = jax.random.split(key, 3)
    params, n_bits = build_shuffle_params(kp, X_DIM, Y_DIM)
    x0 = jax.random.normal(k0, (B, X_DIM), dtype=jnp.float32)
    x1 = jax.random.normal(k1, (B, X_DIM), dtype=jnp.float32)

    y0, y1 = shuffle_layer_forward(params, x0, x1, x_dim=X_DIM, y_dim=Y_DIM,
                                   use_deny=USE_DENY, block_b=128)
    y0, y1 = jax.block_until_ready((y0, y1))

    r0, r1 = _reference(params, x0, x1, x_dim=X_DIM, y_dim=Y_DIM, use_deny=USE_DENY)
    assert y0.shape == (B, Y_DIM) and y1.shape == (B, Y_DIM), (y0.shape, y1.shape)
    np.testing.assert_allclose(np.asarray(y0), np.asarray(r0), rtol=1e-5, atol=1e-5)
    np.testing.assert_allclose(np.asarray(y1), np.asarray(r1), rtol=1e-5, atol=1e-5)
    print("KERNEL_OK")
</pallas_src>

<mosaic_0001>
module attributes {stable_mosaic.version = 11 : i64} {
  func.func @_shuffle_kernel(%arg0: i32, %arg1: memref<2x1xf32, #tpu.memory_space<smem>>, %arg2: memref<4x1xf32, #tpu.memory_space<vmem>>, %arg3: memref<4x128xf32, #tpu.memory_space<vmem>>, %arg4: memref<4x128xf32, #tpu.memory_space<vmem>>, %arg5: memref<2x128xf32, #tpu.memory_space<vmem>>) attributes {dimension_semantics = [#tpu.dimension_semantics<parallel>], iteration_bounds = array<i64: 4>, scalar_prefetch = 0 : i64, scratch_operands = 0 : i64, tpu.core_type = #tpu.core_type<tc>, window_params = [{transform_indices = @transform_0, window_bounds = array<i64: 2, 1>}, {pipeline_mode = #tpu.pipeline_mode<synchronous>, transform_indices = @transform_1, window_bounds = array<i64: 4, 1>}, {transform_indices = @transform_2, window_bounds = array<i64: 4, 128>}, {transform_indices = @transform_3, window_bounds = array<i64: 4, 128>}, {transform_indices = @transform_4, window_bounds = array<i64: 2, 128>}]} {
    %c0 = arith.constant 0 : index
    %c0_0 = arith.constant 0 : index
    %0 = vector.load %arg3[%c0, %c0_0] : memref<4x128xf32, #tpu.memory_space<vmem>>, vector<4x128xf32>
    %c0_1 = arith.constant 0 : index
    %c0_2 = arith.constant 0 : index
    %1 = vector.load %arg4[%c0_1, %c0_2] : memref<4x128xf32, #tpu.memory_space<vmem>>, vector<4x128xf32>
    %c0_3 = arith.constant 0 : index
    %c0_4 = arith.constant 0 : index
    %2 = vector.load %arg2[%c0_3, %c0_4] : memref<4x1xf32, #tpu.memory_space<vmem>>, vector<4x1xf32>
    %cst = arith.constant dense<0xFF800000> : vector<128xf32>
    %3 = vector.multi_reduction <maximumf>, %0, %cst [0] : vector<4x128xf32> to vector<128xf32>
    %4 = vector.shape_cast %3 : vector<128xf32> to vector<1x128xf32>
    %cst_5 = arith.constant dense<0xFF800000> : vector<128xf32>
    %5 = vector.multi_reduction <maximumf>, %1, %cst_5 [0] : vector<4x128xf32> to vector<128xf32>
    %6 = vector.shape_cast %5 : vector<128xf32> to vector<1x128xf32>
    %cst_6 = arith.constant 0xFF800000 : f32
    %7 = vector.broadcast %cst_6 : f32 to vector<1x128xf32>
    %8 = arith.cmpf oeq, %4, %7 : vector<1x128xf32>
    %cst_7 = arith.constant 0.000000e+00 : f32
    %9 = vector.broadcast %cst_7 : f32 to vector<1x128xf32>
    %10 = arith.select %8, %9, %4 : vector<1x128xi1>, vector<1x128xf32>
    %cst_8 = arith.constant 0xFF800000 : f32
    %11 = vector.broadcast %cst_8 : f32 to vector<1x128xf32>
    %12 = arith.cmpf oeq, %6, %11 : vector<1x128xf32>
    %cst_9 = arith.constant 0.000000e+00 : f32
    %13 = vector.broadcast %cst_9 : f32 to vector<1x128xf32>
    %14 = arith.select %12, %13, %6 : vector<1x128xi1>, vector<1x128xf32>
    %15 = vector.broadcast %10 : vector<1x128xf32> to vector<4x128xf32>
    %16 = arith.subf %0, %15 : vector<4x128xf32>
    %17 = math.exp %16 : vector<4x128xf32>
    %18 = vector.broadcast %14 : vector<1x128xf32> to vector<4x128xf32>
    %19 = arith.subf %1, %18 : vector<4x128xf32>
    %20 = math.exp %19 : vector<4x128xf32>
    %21 = vector.broadcast %2 : vector<4x1xf32> to vector<4x128xf32>
    %22 = arith.mulf %21, %17 : vector<4x128xf32>
    %cst_10 = arith.constant dense<0.000000e+00> : vector<128xf32>
    %23 = vector.multi_reduction <add>, %22, %cst_10 [0] : vector<4x128xf32> to vector<128xf32>
    %24 = vector.shape_cast %23 : vector<128xf32> to vector<1x128xf32>
    %25 = math.log %24 : vector<1x128xf32>
    %26 = arith.addf %10, %25 : vector<1x128xf32>
    %27 = vector.broadcast %2 : vector<4x1xf32> to vector<4x128xf32>
    %28 = arith.mulf %27, %20 : vector<4x128xf32>
    %cst_11 = arith.constant dense<0.000000e+00> : vector<128xf32>
    %29 = vector.multi_reduction <add>, %28, %cst_11 [0] : vector<4x128xf32> to vector<128xf32>
    %30 = vector.shape_cast %29 : vector<128xf32> to vector<1x128xf32>
    %31 = math.log %30 : vector<1x128xf32>
    %32 = arith.addf %14, %31 : vector<1x128xf32>
    %c0_12 = arith.constant 0 : index
    %c0_13 = arith.constant 0 : index
    %33 = memref.load %arg1[%c0_12, %c0_13] : memref<2x1xf32, #tpu.memory_space<smem>>
    %c1 = arith.constant 1 : index
    %c0_14 = arith.constant 0 : index
    %34 = memref.load %arg1[%c1, %c0_14] : memref<2x1xf32, #tpu.memory_space<smem>>
    %35 = vector.broadcast %33 : f32 to vector<1x128xf32>
    %36 = arith.addf %35, %26 : vector<1x128xf32>
    %37 = vector.broadcast %34 : f32 to vector<1x128xf32>
    %38 = arith.addf %37, %32 : vector<1x128xf32>
    %39 = arith.maximumf %36, %38 : vector<1x128xf32>
    %cst_15 = arith.constant 0xFF800000 : f32
    %40 = vector.broadcast %cst_15 : f32 to vector<1x128xf32>
    %41 = arith.cmpf oeq, %39, %40 : vector<1x128xf32>
    %cst_16 = arith.constant 0.000000e+00 : f32
    %42 = vector.broadcast %cst_16 : f32 to vector<1x128xf32>
    %43 = arith.select %41, %42, %39 : vector<1x128xi1>, vector<1x128xf32>
    %44 = arith.subf %36, %43 : vector<1x128xf32>
    %45 = math.exp %44 : vector<1x128xf32>
    %46 = arith.subf %38, %43 : vector<1x128xf32>
    %47 = math.exp %46 : vector<1x128xf32>
    %48 = arith.addf %45, %47 : vector<1x128xf32>
    %49 = math.log %48 : vector<1x128xf32>
    %50 = arith.addf %43, %49 : vector<1x128xf32>
    %51 = vector.broadcast %33 : f32 to vector<1x128xf32>
    %52 = arith.addf %51, %32 : vector<1x128xf32>
    %cst_17 = arith.constant 0.693147182 : f32
    %53 = vector.broadcast %cst_17 : f32 to vector<1x128xf32>
    %54 = arith.addf %52, %53 : vector<1x128xf32>
    %55 = tpu.concatenate %50, %54 in 0 : vector<1x128xf32>, vector<1x128xf32> -> vector<2x128xf32>
    %c0_18 = arith.constant 0 : index
    %c0_19 = arith.constant 0 : index
    %56 = vector.load %arg5[%c0_18, %c0_19] : memref<2x128xf32, #tpu.memory_space<vmem>>, vector<2x128xf32>
    tpu.vector_store %arg5[%c0_18, %c0_19], %55 {strides = array<i32>} : memref<2x128xf32, #tpu.memory_space<vmem>>, vector<2x128xf32>,
    return
  }
  func.func @transform_0(%arg0: i32) -> (i32, i32) {
    %c0_i32 = arith.constant 0 : i32
    %c0_i32_0 = arith.constant 0 : i32
    %c0_i32_1 = arith.constant 0 : i32
    return %c0_i32, %c0_i32_0 : i32, i32
  }
  func.func @transform_1(%arg0: i32) -> (i32, i32) {
    %c0_i32 = arith.constant 0 : i32
    %c0_i32_0 = arith.constant 0 : i32
    %c0_i32_1 = arith.constant 0 : i32
    return %c0_i32, %c0_i32_0 : i32, i32
  }
  func.func @transform_2(%arg0: i32) -> (i32, i32) {
    %c0_i32 = arith.constant 0 : i32
    %c0_i32_0 = arith.constant 0 : i32
    return %c0_i32, %arg0 : i32, i32
  }
  func.func @transform_3(%arg0: i32) -> (i32, i32) {
    %c0_i32 = arith.constant 0 : i32
    %c0_i32_0 = arith.constant 0 : i32
    return %c0_i32, %arg0 : i32, i32
  }
  func.func @transform_4(%arg0: i32) -> (i32, i32) {
    %c0_i32 = arith.constant 0 : i32
    %c0_i32_0 = arith.constant 0 : i32
    return %c0_i32, %arg0 : i32, i32
  }
}

</mosaic_0001>

<llo_original>
// kernel: tpu_custom_call.1
$region0: #{tpu_custom_call.1}
  #allocation0 [shape = 'u32[]', space=smem, size = 0x4, offset = 0x4, fixed_abs, tag = 'smem constant byte address 0x4 - core index']
  #allocation1 [shape = 'u32[144,128]{1,0:T(1,128)}', space=vmem, size = 0x12000, scoped, tag = 'internal scratch']
  %s0 = inlined_call_operand.vmem [shape: f32[2,1], index: 0, kind: input, shape index: {}]
  %s1 = inlined_call_operand.vmem [shape: f32[4,1], index: 1, kind: input, shape index: {}]
  %s2 = inlined_call_operand.vmem [shape: f32[4,512], index: 2, kind: input, shape index: {}]
  %s3 = inlined_call_operand.hbm [shape: f32[4,512], index: 3, kind: input, shape index: {}]
  %s4 = inlined_call_operand.hbm [shape: f32[2,512], index: 4, kind: output, shape index: {}]
  %s5 = sld [smem:[#allocation0]]
  $region57: #{tpu_custom_call.1} parent=0
    _
  %s7 = ssub.s32 1, %s5
  %s8 = scalar_select 0, %s7, %s5
  $region1: #{tpu_custom_call.1} parent=0
    #allocation2 [shape = 'u8[1024]{0}', space=smem, size = 0x400, scoped, tag = 'input window, operand 0, single buffered']
    #allocation3 [shape = 's32[2]{0}', space=sflag, size = 0x8, scoped, tag = 'scoped memory for tpu_custom_call.1']
    #allocation4 [shape = 's32[2]{0}', space=sflag, size = 0x8, scoped, tag = 'scoped memory for tpu_custom_call.1']
    #allocation5 [shape = 's32[2]{0}', space=sflag, size = 0x8, scoped, tag = 'scoped memory for tpu_custom_call.1']
    #allocation6 [shape = 'u8[4096]{0}', space=vmem, size = 0x1000, scoped, tag = 'input window, operand 3']
    #allocation7 [shape = 'u8[2048]{0}', space=vmem, size = 0x800, scoped, tag = 'output window, operand 0']
    %9 = vsyncpa [#allocation5], 0
    %10 = vsyncpa [#allocation3], 0
    %s11 = scalar_lea.sflag [#allocation3], 1
    %12 = vsyncpa %s11, 0
    %13 = vsyncpa [#allocation4], 0
    %s14 = scalar_lea.sflag [#allocation4], 1
    %15 = vsyncpa %s14, 0
    loop: start=0, step=1, limit=6
    $region2: #{tpu_custom_call.1} parent=1 // loop_pre_header
      _
    $region3: #{tpu_custom_call.1} parent=1 // loop_header
      %s17 = sphi 0, %s21
      %p18 = scmp.ge.s32.totalorder %s17, 6
      %s25 = sphi 0, %s25
      %s27 = sphi 0, %s25
      %s28 = sphi 0, %s27
      %s42 = sphi 0, %s28
      %s46 = sphi 0, %s46
      %s48 = sphi 0, %s46
      %s49 = sphi 0, %s48
      %s63 = sphi 0, %s49
      %s69 = sphi 0, %s71
      %s72 = sphi 0, %s69
      %s73 = sphi 0, %s72
      %s89 = sphi 0, %s73
      %s95 = sphi 0, %s97
      %s98 = sphi 0, %s95
      %s99 = sphi 0, %s98
      %s115 = sphi 0, %s99
      %s121 = sphi 0, %s123
      %s124 = sphi 0, %s121
      %s125 = sphi 0, %s124
      %s141 = sphi 0, %s125
    $region4: #{tpu_custom_call.1} parent=1 // loop_header_branch
      %20 = sbr.rel (%p18) target = $region8
    $region5: #{tpu_custom_call.1} parent=1 // loop_body
      %s22 = ssub.s32 %s17, 1
      %s23 = ssub.s32 %s17, 2
      %s24 = sadd.s32 %s17, 1
      %s26 = sadd.s32 %s25, 1
      %p29 = scmp.eq.s32.totalorder %s17, 3
      %p30 = scmp.ne.s32.totalorder %s25, %s27
      %p31 = scmp.eq.s32.totalorder %s17, 0
      %p32 = por %p30, %p31
      %p33 = scmp.ne.s32.totalorder %s25, %s27
      %p34 = scmp.eq.s32.totalorder %s22, 3
      %p35 = por %p33, %p34
      %p36 = scmp.ne.s32.totalorder %s27, %s28
      %p37 = scmp.eq.s32.totalorder %s22, 0
      %p38 = por %p36, %p37
      %p39 = scmp.ne.s32.totalorder %s27, %s28
      %p40 = scmp.eq.s32.totalorder %s23, 3
      %p41 = por %p39, %p40
      %p43 = scmp.ne.s32.totalorder %s28, %s42
      %p44 = scmp.eq.s32.totalorder %s23, 0
      %p45 = por %p43, %p44
      %s47 = sadd.s32 %s46, 1
      %p50 = scmp.eq.s32.totalorder %s17, 3
      %p51 = scmp.ne.s32.totalorder %s46, %s48
      %p52 = scmp.eq.s32.totalorder %s17, 0
      %p53 = por %p51, %p52
      %p54 = scmp.ne.s32.totalorder %s46, %s48
      %p55 = scmp.eq.s32.totalorder %s22, 3
      %p56 = por %p54, %p55
      %p57 = scmp.ne.s32.totalorder %s48, %s49
      %p58 = scmp.eq.s32.totalorder %s22, 0
      %p59 = por %p57, %p58
      %p60 = scmp.ne.s32.totalorder %s48, %s49
      %p61 = scmp.eq.s32.totalorder %s23, 3
      %p62 = por %p60, %p61
      %p64 = scmp.ne.s32.totalorder %s49, %s63
      %p65 = scmp.eq.s32.totalorder %s23, 0
      %p66 = por %p64, %p65
      %s67 = ssub.s32 %s17, %s24
      %p68 = scmp.eq.s32.totalorder %s67, 0
      %s70 = sadd.s32 %s69, 1
      %s71 = scalar_select %p68, %s69, %s70
      %p74 = pneg %p68
      %p75 = scmp.eq.s32.totalorder %s17, 3
      %p76 = por %p74, %p75
      %p77 = scmp.ne.s32.totalorder %s69, %s72
      %p78 = scmp.eq.s32.totalorder %s17, 0
      %p79 = por %p77, %p78
      %p80 = scmp.ne.s32.totalorder %s69, %s72
      %p81 = scmp.eq.s32.totalorder %s22, 3
      %p82 = por %p80, %p81
      %p83 = scmp.ne.s32.totalorder %s72, %s73
      %p84 = scmp.eq.s32.totalorder %s22, 0
      %p85 = por %p83, %p84
      %p86 = scmp.ne.s32.totalorder %s72, %s73
      %p87 = scmp.eq.s32.totalorder %s23, 3
      %p88 = por %p86, %p87
      %p90 = scmp.ne.s32.totalorder %s73, %s89
      %p91 = scmp.eq.s32.totalorder %s23, 0
      %p92 = por %p90, %p91
      %s93 = ssub.s32 %s17, %s24
      %p94 = scmp.eq.s32.totalorder %s93, 0
      %s96 = sadd.s32 %s95, 1
      %s97 = scalar_select %p94, %s95, %s96
      %p100 = pneg %p94
      %p101 = scmp.eq.s32.totalorder %s17, 3
      %p102 = por %p100, %p101
      %p103 = scmp.ne.s32.totalorder %s95, %s98
      %p104 = scmp.eq.s32.totalorder %s17, 0
      %p105 = por %p103, %p104
      %p106 = scmp.ne.s32.totalorder %s95, %s98
      %p107 = scmp.eq.s32.totalorder %s22, 3
      %p108 = por %p106, %p107
      %p109 = scmp.ne.s32.totalorder %s98, %s99
      %p110 = scmp.eq.s32.totalorder %s22, 0
      %p111 = por %p109, %p110
      %p112 = scmp.ne.s32.totalorder %s98, %s99
      %p113 = scmp.eq.s32.totalorder %s23, 3
      %p114 = por %p112, %p113
      %p116 = scmp.ne.s32.totalorder %s99, %s115
      %p117 = scmp.eq.s32.totalorder %s23, 0
      %p118 = por %p116, %p117
      %s119 = ssub.s32 %s17, %s24
      %p120 = scmp.eq.s32.totalorder %s119, 0
      %s122 = sadd.s32 %s121, 1
      %s123 = scalar_select %p120, %s121, %s122
      %p126 = pneg %p120
      %p127 = scmp.eq.s32.totalorder %s17, 3
      %p128 = por %p126, %p127
      %p129 = scmp.ne.s32.totalorder %s121, %s124
      %p130 = scmp.eq.s32.totalorder %s17, 0
      %p131 = por %p129, %p130
      %p132 = scmp.ne.s32.totalorder %s121, %s124
      %p133 = scmp.eq.s32.totalorder %s22, 3
      %p134 = por %p132, %p133
      %p135 = scmp.ne.s32.totalorder %s124, %s125
      %p136 = scmp.eq.s32.totalorder %s22, 0
      %p137 = por %p135, %p136
      %p138 = scmp.ne.s32.totalorder %s124, %s125
      %p139 = scmp.eq.s32.totalorder %s23, 3
      %p140 = por %p138, %p139
      %p142 = scmp.ne.s32.totalorder %s125, %s141
      %p143 = scmp.eq.s32.totalorder %s23, 0
      %p144 = por %p142, %p143
      %p145 = scmp.le.s32.totalorder 1, %s17
      %p146 = scmp.lt.s32.totalorder %s17, 5
      %p147 = pnand %p145, %p146
      %p148 = pneg %p147
      // Predicated region
      $region9: #{tpu_custom_call.1} parent=5 // pred_check
        _
      $region10: #{tpu_custom_call.1} parent=5 // pred_check_branch
        %150 = sbr.rel (%p147) target = $region12
      $region11: #{tpu_custom_call.1} parent=5 // pred_region
        %s151 = ssub.s32 %s17, 1
        // Predicated region
        $region13: #{tpu_custom_call.1} parent=11 // pred_check
          %p152 = pneg %p38
        $region14: #{tpu_custom_call.1} parent=11 // pred_check_branch
          %154 = sbr.rel (%p152) target = $region16
        $region15: #{tpu_custom_call.1} parent=11 // pred_region
          %s156 = ssub.s32 32, 32
          %157 = vsyncadd [#allocation5], %s156
          %s159 = sshll.u32 %s0, 4
          %s160 = int_to_ptr.vmem [resolvable:$true] %s159
          %162 = dma.vmem_to_smem %s160, 32, [#allocation2], [#allocation5]
        $region16: #{tpu_custom_call.1} parent=11 // pred_fallthru
          _
        // Predicated region
        $region17: #{tpu_custom_call.1} parent=11 // pred_check
          %p163 = pneg %p59
        $region18: #{tpu_custom_call.1} parent=11 // pred_check_branch
          %165 = sbr.rel (%p163) target = $region20
        $region19: #{tpu_custom_call.1} parent=11 // pred_region
          _
        $region20: #{tpu_custom_call.1} parent=11 // pred_fallthru
          _
      $region12: #{tpu_custom_call.1} parent=5 // pred_fallthru
        _
      %p166 = scmp.lt.s32.totalorder %s17, 4
      // Predicated region
      $region21: #{tpu_custom_call.1} parent=5 // pred_check
        %p167 = pneg %p166
      $region22: #{tpu_custom_call.1} parent=5 // pred_check_branch
        %169 = sbr.rel (%p167) target = $region24
      $region23: #{tpu_custom_call.1} parent=5 // pred_region
        // Predicated region
        $region25: #{tpu_custom_call.1} parent=23 // pred_check
          %p170 = pneg %p79
        $region26: #{tpu_custom_call.1} parent=23 // pred_check_branch
          %172 = sbr.rel (%p170) target = $region28
        $region27: #{tpu_custom_call.1} parent=23 // pred_region
          %p173 = scmp.lt.s32.totalorder %s17, 3
          %s174 = scalar_select %p173, %s17, 3
          %s175 = smul.addr %s174, 4
          %s176 = scalar_lea.vmem %s2, %s175
        $region28: #{tpu_custom_call.1} parent=23 // pred_fallthru
          _
        // Predicated region
        $region29: #{tpu_custom_call.1} parent=23 // pred_check
          %p177 = pneg %p105
        $region30: #{tpu_custom_call.1} parent=23 // pred_check_branch
          %179 = sbr.rel (%p177) target = $region32
        $region31: #{tpu_custom_call.1} parent=23 // pred_region
          %s180 = sand.u32 %s95, 1
          %s181 = scalar_lea.sflag [#allocation3], %s180
          %s182 = sand.u32 %s95, 1
          %s183 = smul.addr %s182, 4
          %s184 = scalar_lea.vmem [#allocation6], %s183
          %s186 = ssub.s32 64, 64
          %187 = vsyncadd %s181, %s186
          %s188 = smul.addr %s17, 64
          %s189 = scalar_lea.hbm %s3, %s188
          %s191 = sshll.u32 %s184, 4
          %s192 = int_to_ptr.vmem [resolvable:$true] %s191
          %194 = dma.hbm_to_vmem [thread:$0]  %s189, 64, %s192, %s181
        $region32: #{tpu_custom_call.1} parent=23 // pred_fallthru
          _
      $region24: #{tpu_custom_call.1} parent=5 // pred_fallthru
        _
      %p195 = scmp.le.s32.totalorder 1, %s17
      %p196 = scmp.lt.s32.totalorder %s17, 5
      %p197 = pnand %p195, %p196
      %p198 = pneg %p197
      // Predicated region
      $region33: #{tpu_custom_call.1} parent=5 // pred_check
        _
      $region34: #{tpu_custom_call.1} parent=5 // pred_check_branch
        %200 = sbr.rel (%p197) target = $region36
      $region35: #{tpu_custom_call.1} parent=5 // pred_region
        %s201 = ssub.s32 %s17, 1
        // Predicated region
        $region37: #{tpu_custom_call.1} parent=35 // pred_check
          %p202 = pneg %p38
        $region38: #{tpu_custom_call.1} parent=35 // pred_check_branch
          %204 = sbr.rel (%p202) target = $region40
        $region39: #{tpu_custom_call.1} parent=35 // pred_region
          %205 = dma.done [#allocation5], 32
        $region40: #{tpu_custom_call.1} parent=35 // pred_fallthru
          _
        %s206 = sand.u32 %s98, 1
        %s207 = scalar_lea.sflag [#allocation3], %s206
        %s208 = sand.u32 %s98, 1
        %s209 = smul.addr %s208, 4
        %s210 = scalar_lea.vmem [#allocation6], %s209
        // Predicated region
        $region41: #{tpu_custom_call.1} parent=35 // pred_check
          %p211 = pneg %p111
        $region42: #{tpu_custom_call.1} parent=35 // pred_check_branch
          %213 = sbr.rel (%p211) target = $region44
        $region43: #{tpu_custom_call.1} parent=35 // pred_region
          %214 = dma.done %s207, 64
        $region44: #{tpu_custom_call.1} parent=35 // pred_fallthru
          _
        %215 = sfence
        %p216 = pneg %p38
        %p217 = pneg %p35
        %p218 = pneg %p59
        %p219 = pneg %p56
        %p220 = scmp.lt.s32.totalorder %s22, 3
        %s221 = scalar_select %p220, %s22, 3
        %s222 = smul.addr %s221, 4
        %s223 = scalar_lea.vmem %s2, %s222
        %p224 = pneg %p85
        %p225 = pneg %p82
        %s226 = sand.u32 %s98, 1
        %s227 = scalar_lea.sflag [#allocation3], %s226
        %s228 = sand.u32 %s98, 1
        %s229 = smul.addr %s228, 4
        %s230 = scalar_lea.vmem [#allocation6], %s229
        %p231 = pneg %p111
        %p232 = pneg %p108
        %p233 = pneg %p137
        %p234 = pneg %p134
        %s235 = sand.u32 %s124, 1
        %s236 = scalar_lea.sflag [#allocation4], %s235
        %s237 = sand.u32 %s124, 1
        %s238 = smul.addr %s237, 2
        %s239 = scalar_lea.vmem [#allocation7], %s238
        %p240 = scmp.lt.s32.totalorder %s22, 3
        %s241 = scalar_select %p240, %s22, 3
        %s242 = smul.addr %s241, 4
        %s243 = scalar_lea.vmem %s2, %s242
        %v244 = vld [vmem:[%s243] sm:$0xf]
        %v245 = vld [vmem:[%s210] sm:$0xf]
        %v246 = vld [vmem:[%s1] sm:$0xf]
        %vm247 = vcmask 1043456
        %v248 = vsel %vm247, %v244, -inf
        %v249 = vrot.slane %v248, 4
        %v250 = vmax.f32 %v248, %v249
        %v251 = vrot.slane %v250, 2
        %v252 = vmax.f32 %v250, %v251
        %v253 = vrot.slane %v252, 1
        %v254 = vmax.f32 %v252, %v253
        %v255 = vsel %vm247, %v245, -inf
        %v256 = vrot.slane %v255, 4
        %v257 = vmax.f32 %v255, %v256
        %v258 = vrot.slane %v257, 2
        %v259 = vmax.f32 %v257, %v258
        %v260 = vrot.slane %v259, 1
        %v261 = vmax.f32 %v259, %v260
        %vm262 = vcmp.eq.f32.partialorder %v254, -inf
        %v263 = vsel %vm262, 0.0, %v254
        %vm264 = vcmp.eq.f32.partialorder %v261, -inf
        %v265 = vsel %vm264, 0.0, %v261
        %v266 = vsub.f32 %v244, %v263
        %v267 = vmul.f32 %v266, 1.442695
        %v268 = vpow.pop %v267
        %v269 = vsub.f32 %v245, %v265
        %v270 = vmul.f32 %v269, 1.442695
        %v271 = vpow.pop %v270
        %273 = vset.pattern.permute.xlu0 0
        %274 = vperm.xlu0 %273, %v246
        %v275 = vpop.permute.xlu0 %274
        %v277 = vmul.f32 %v275, %v268
        %v278 = vsel %vm247, %v277, 0.0
        %v279 = vrot.slane %v278, 4
        %v280 = vadd.f32 %v278, %v279
        %v281 = vrot.slane %v280, 2
        %v282 = vadd.f32 %v280, %v281
        %v283 = vrot.slane %v282, 1
        %v284 = vadd.f32 %v282, %v283
        %v285 = vlog2.pop %v284
        %v286 = vmul.f32 %v285, 0.6931472
        %v287 = vadd.f32 %v263, %v286
        %v288 = vmul.f32 %v275, %v271
        %v289 = vsel %vm247, %v288, 0.0
        %v290 = vrot.slane %v289, 4
        %v291 = vadd.f32 %v289, %v290
        %v292 = vrot.slane %v291, 2
        %v293 = vadd.f32 %v291, %v292
        %v294 = vrot.slane %v293, 1
        %v295 = vadd.f32 %v293, %v294
        %v296 = vlog2.pop %v295
        %v297 = vmul.f32 %v296, 0.6931472
        %v298 = vadd.f32 %v265, %v297
        %s299 = sld [smem:[#allocation2]]
        %s300 = sld [smem:[#allocation2 + $0x80]]
        %v301 = vstv %s299
        %v302 = vadd.f32 %v301, %v287
        %v303 = vstv %s300
        %v304 = vadd.f32 %v303, %v298
        %v305 = vmax.f32 %v302, %v304
        %vm306 = vcmp.eq.f32.partialorder %v305, -inf
        %v307 = vsel %vm306, 0.0, %v305
        %v308 = vsub.f32 %v302, %v307
        %v309 = vmul.f32 %v308, 1.442695
        %v310 = vpow.pop %v309
        %v311 = vsub.f32 %v304, %v307
        %v312 = vmul.f32 %v311, 1.442695
        %v313 = vpow.pop %v312
        %v314 = vadd.f32 %v310, %v313
        %v315 = vlog2.pop %v314
        %v316 = vmul.f32 %v315, 0.6931472
        %v317 = vadd.f32 %v307, %v316
        %v318 = vadd.f32 %v301, %v298
        %v319 = vadd.f32 %v318, 0.6931472
        %vm320 = vcmask 1040384
        %v321 = vsel %vm320, %v317, %v319
        %322 = vst [vmem:[%s239] sm:$0x3] %v321
        %s323 = sand.u32 %s124, 1
        %s324 = scalar_lea.sflag [#allocation4], %s323
        %s325 = sand.u32 %s124, 1
        %s326 = smul.addr %s325, 2
        %s327 = scalar_lea.vmem [#allocation7], %s326
        // Predicated region
        $region45: #{tpu_custom_call.1} parent=35 // pred_check
          %p328 = pneg %p134
        $region46: #{tpu_custom_call.1} parent=35 // pred_check_branch
          %330 = sbr.rel (%p328) target = $region48
        $region47: #{tpu_custom_call.1} parent=35 // pred_region
          %s332 = ssub.s32 32, 32
          %333 = vsyncadd %s324, %s332
          %s334 = smul.addr %s22, 32
          %s335 = scalar_lea.hbm %s4, %s334
          %s337 = sshll.u32 %s327, 4
          %s338 = int_to_ptr.vmem [resolvable:$true] %s337
          %340 = dma.vmem_to_hbm [thread:$0]  %s338, 32, %s335, %s324
        $region48: #{tpu_custom_call.1} parent=35 // pred_fallthru
          _
      $region36: #{tpu_custom_call.1} parent=5 // pred_fallthru
        _
      %p341 = scmp.le.s32.totalorder 2, %s17
      // Predicated region
      $region49: #{tpu_custom_call.1} parent=5 // pred_check
        %p342 = pneg %p341
      $region50: #{tpu_custom_call.1} parent=5 // pred_check_branch
        %344 = sbr.rel (%p342) target = $region52
      $region51: #{tpu_custom_call.1} parent=5 // pred_region
        %s345 = ssub.s32 %s17, 2
        // Predicated region
        $region53: #{tpu_custom_call.1} parent=51 // pred_check
          %p346 = pneg %p140
        $region54: #{tpu_custom_call.1} parent=51 // pred_check_branch
          %348 = sbr.rel (%p346) target = $region56
        $region55: #{tpu_custom_call.1} parent=51 // pred_region
          %s349 = sand.u32 %s125, 1
          %s350 = scalar_lea.sflag [#allocation4], %s349
          %s351 = sand.u32 %s125, 1
          %s352 = smul.addr %s351, 2
          %s353 = scalar_lea.vmem [#allocation7], %s352
          %354 = dma.done %s350, 32
        $region56: #{tpu_custom_call.1} parent=51 // pred_fallthru
          _
      $region52: #{tpu_custom_call.1} parent=5 // pred_fallthru
        _
    $region6: #{tpu_custom_call.1} parent=1 // loop_footer
      %s21 = sadd.s32 1, %s17
    $region7: #{tpu_custom_call.1} parent=1 // loop_footer_branch
      %16 = sbr.rel target = $region3
    $region8: #{tpu_custom_call.1} parent=1 // loop_exit
      _
    %355 = vsyncpa [#allocation3], 1
    %s356 = scalar_lea.sflag [#allocation3], 1
    %357 = vsyncpa %s356, 1
    %358 = vsyncpa [#allocation4], 1
    %s359 = scalar_lea.sflag [#allocation4], 1
    %360 = vsyncpa %s359, 1
    %361 = vsyncpa [#allocation5], 1
    %s362 = scalar_lea.sflag [#allocation5], 1
    %363 = vsyncpa %s362, 1

</llo_original>
